<compile_context>
chip_gen: v5e
topology: v5e:2x2
jax: 0.10.0
libtpu: 0.0.40
codegen_flags: <defaults>
</compile_context>

<pallas_src>
import functools
import math

import jax
import jax.numpy as jnp
from jax.experimental import pallas as pl
from jax.experimental.pallas import tpu as pltpu


def _round_up(x, m):
    return ((x + m - 1) // m) * m


# ----------------------------------------------------------------------------
# Kernel 1: 1x1 conv (bf16 channel matmul on MXU) + per-channel moment
# accumulation across HW tiles.  grid = (B, HW_tiles), HW axis is "arbitrary".
# ----------------------------------------------------------------------------
def conv_moments_kernel(x_ref, w_ref, b_ref, y_ref, sum_ref, sq_ref,
                        *, hw_real, blk_hw):
    j = pl.program_id(1)

    x = x_ref[0]                                   # (Cin, HWt)  bf16
    w = w_ref[...]                                 # (Cattn, Cin) bf16
    y = jnp.dot(w, x, preferred_element_type=jnp.float32) + b_ref[...]
    y_ref[0] = y                                   # unnormalized conv output

    @pl.when(j == 0)
    def _():
        sum_ref[...] = jnp.zeros_like(sum_ref)
        sq_ref[...] = jnp.zeros_like(sq_ref)

    # Mask out HW padding columns (they hold `bias`, not real data).
    lane = jax.lax.broadcasted_iota(jnp.int32, (1, blk_hw), 1) + j * blk_hw
    valid = lane < hw_real
    ym = jnp.where(valid, y, 0.0)

    # Reduce over the lane axis first (no P matmul); group reduce is done on
    # tiny (B, c_attn) arrays outside the kernel.
    sum_ref[...] += jnp.sum(ym, axis=-1, keepdims=True)[None]
    sq_ref[...] += jnp.sum(ym * ym, axis=-1, keepdims=True)[None]


# ----------------------------------------------------------------------------
# Kernel 2: fused GroupNorm affine + per-tile multi-head local attention.
# Tile index T lives on the 128-lane axis; all math is VPU/EUP elementwise
# across >=128 tiles per vreg.
# ----------------------------------------------------------------------------
def local_attn_kernel(kqv_ref, scale_ref, shift_ref, o_ref,
                      *, num_heads, key_size, kk):
    x = kqv_ref[...]                               # (c_attn, KK, Tb) f32
    sc = scale_ref[...][:, None, :]                # (c_attn, 1, Tb)
    sh = shift_ref[...][:, None, :]
    xn = x * sc + sh                               # fused GroupNorm (affine)

    inv_sqrt_ks = 1.0 / math.sqrt(key_size)
    inv_kk = 1.0 / kk
    outs = []
    for h in range(num_heads):
        base = h * 3 * key_size
        k = xn[base:base + key_size]               # (KS, KK, Tb)
        q = xn[base + key_size:base + 2 * key_size]
        v = xn[base + 2 * key_size:base + 3 * key_size]

        # out.mean(-1) == value @ (mean_i softmax(sal)_i), so only the
        # i-averaged mask is needed.
        msum = jnp.zeros(k.shape[1:], jnp.float32)          # (KK, Tb)
        for i in range(kk):
            # sal[j, t] = sum_c q[c, i, t] * k[c, j, t] / sqrt(KS)
            sal = jnp.sum(q[:, i:i + 1, :] * k, axis=0) * inv_sqrt_ks
            m = jnp.max(sal, axis=0, keepdims=True)
            e = jnp.exp(sal - m)
            s = jnp.sum(e, axis=0, keepdims=True)
            msum = msum + e * pl.reciprocal(s, approx=True)

        # out[c, t] = sum_j v[c, j, t] * mean_i(mask[i, j, t])
        out_h = jnp.sum(v * (msum * inv_kk)[None, :, :], axis=1)   # (KS, Tb)
        outs.append(out_h)

    o_ref[...] = jnp.concatenate(outs, axis=0)     # (NH*KS, Tb) lane-dense


# ----------------------------------------------------------------------------
# Parameter init (deterministic, synthetic)
# ----------------------------------------------------------------------------
def init_params(key, in_channels, num_heads, key_size):
    c_attn = 3 * key_size * num_heads
    k1, k2, k3, k4 = jax.random.split(key, 4)
    bound = 1.0 / math.sqrt(in_channels)           # 1x1 conv fan-in
    w = jax.random.uniform(k1, (c_attn, in_channels), jnp.float32, -bound, bound)
    b = jax.random.uniform(k2, (c_attn,), jnp.float32, -bound, bound)
    gamma = 1.0 + 0.1 * jax.random.normal(k3, (c_attn,), jnp.float32)
    beta = 0.1 * jax.random.normal(k4, (c_attn,), jnp.float32)
    return w, b, gamma, beta


# ----------------------------------------------------------------------------
# Forward wrapper
# ----------------------------------------------------------------------------
def local_attention_2d(x, params, *, num_heads, key_size, kernel_size,
                       stride=1, padding=0):
    w, bias, gamma, beta = params
    B, Cin, H, W = x.shape
    NH, KS, K = num_heads, key_size, kernel_size
    c_attn = 3 * KS * NH
    n_groups = 3 * NH
    HW = H * W
    eps = 1e-5

    # ---- Kernel 1: conv + moments, tiled over (B, HW) ----
    HW_pad = _round_up(HW, 128)
    HWt = min(1024, HW_pad)
    HW_pad = _round_up(HW_pad, HWt)
    x_flat = x.reshape(B, Cin, HW).astype(jnp.bfloat16)
    x_flat = jnp.pad(x_flat, ((0, 0), (0, 0), (0, HW_pad - HW)))

    y_full, ch_sum, ch_sq = pl.pallas_call(
        functools.partial(conv_moments_kernel, hw_real=HW, blk_hw=HWt),
        out_shape=(jax.ShapeDtypeStruct((B, c_attn, HW_pad), jnp.float32),
                   jax.ShapeDtypeStruct((B, c_attn, 1), jnp.float32),
                   jax.ShapeDtypeStruct((B, c_attn, 1), jnp.float32)),
        grid=(B, HW_pad // HWt),
        in_specs=[
            pl.BlockSpec((1, Cin, HWt), lambda b, j: (b, 0, j)),
            pl.BlockSpec((c_attn, Cin), lambda b, j: (0, 0)),
            pl.BlockSpec((c_attn, 1), lambda b, j: (0, 0)),
        ],
        out_specs=(
            pl.BlockSpec((1, c_attn, HWt), lambda b, j: (b, 0, j)),
            pl.BlockSpec((1, c_attn, 1), lambda b, j: (b, 0, 0)),
            pl.BlockSpec((1, c_attn, 1), lambda b, j: (b, 0, 0)),
        ),
        compiler_params=pltpu.CompilerParams(
            dimension_semantics=("parallel", "arbitrary"),
            vmem_limit_bytes=32 * 1024 * 1024),
    )(x_flat, w.astype(jnp.bfloat16), bias.reshape(c_attn, 1))

    # ---- GroupNorm stats from per-channel moments (tiny XLA epilogue) ----
    sum_c = ch_sum[..., 0]                                   # (B, c_attn)
    sq_c = ch_sq[..., 0]
    n = float(KS * HW)                                       # elems per group
    gs = sum_c.reshape(B, n_groups, KS).sum(-1)
    gq = sq_c.reshape(B, n_groups, KS).sum(-1)
    mean_g = gs / n
    var_g = jnp.maximum(gq / n - mean_g * mean_g, 0.0)       # guard cancellation
    rstd_g = jax.lax.rsqrt(var_g + eps)
    mean_ch = jnp.repeat(mean_g, KS, axis=1)                 # (B, c_attn)
    rstd_ch = jnp.repeat(rstd_g, KS, axis=1)
    scale_ch = gamma[None, :] * rstd_ch
    shift_ch = beta[None, :] - mean_ch * scale_ch

    # ---- Tile2d unfold -> (c_attn, K*K, T) with T last (lane axis) ----
    y = y_full[:, :, :HW].reshape(B, c_attn, H, W)
    y_p = jnp.pad(y, ((0, 0), (0, 0), (padding, padding), (padding, padding)))
    Hp, Wp = H + 2 * padding, W + 2 * padding
    OH = (Hp - K) // stride + 1
    OW = (Wp - K) // stride + 1
    if stride == K:
        # Non-overlapping windows: pure space-to-depth (no gather HLO).
        t = y_p[:, :, :OH * K, :OW * K].reshape(B, c_attn, OH, K, OW, K)
    else:
        r = (jnp.arange(OH) * stride)[:, None] + jnp.arange(K)[None, :]
        c = (jnp.arange(OW) * stride)[:, None] + jnp.arange(K)[None, :]
        t = y_p[:, :, r, :]                  # (B, C, OH, K, Wp)
        t = t[:, :, :, :, c]                 # (B, C, OH, K, OW, K)
    T = B * OH * OW
    KK = K * K
    kqv = jnp.transpose(t, (1, 3, 5, 0, 2, 4)).reshape(c_attn, KK, T)

    # Pad T up to a multiple of a lane-dense block (>=128); zero tiles are
    # softmax-safe (uniform mask, zero output) and discarded afterwards.
    Tb = min(512, _round_up(T, 128))
    T_pad = _round_up(T, Tb)
    kqv = jnp.pad(kqv, ((0, 0), (0, 0), (0, T_pad - T)))
    scale_t = jnp.pad(jnp.repeat(scale_ch, OH * OW, axis=0).T,
                      ((0, 0), (0, T_pad - T)))
    shift_t = jnp.pad(jnp.repeat(shift_ch, OH * OW, axis=0).T,
                      ((0, 0), (0, T_pad - T)))

    # ---- Kernel 2: fused GroupNorm affine + local attention over tiles ----
    out_flat = pl.pallas_call(
        functools.partial(local_attn_kernel,
                          num_heads=NH, key_size=KS, kk=KK),
        out_shape=jax.ShapeDtypeStruct((NH * KS, T_pad), jnp.float32),
        grid=(T_pad // Tb,),
        in_specs=[
            pl.BlockSpec((c_attn, KK, Tb), lambda i: (0, 0, i)),
            pl.BlockSpec((c_attn, Tb), lambda i: (0, i)),
            pl.BlockSpec((c_attn, Tb), lambda i: (0, i)),
        ],
        out_specs=pl.BlockSpec((NH * KS, Tb), lambda i: (0, i)),
        compiler_params=pltpu.CompilerParams(
            dimension_semantics=("parallel",),
            vmem_limit_bytes=32 * 1024 * 1024),
    )(kqv, scale_t, shift_t)

    out = out_flat[:, :T].reshape(NH * KS, B, OH, OW)
    return jnp.transpose(out, (1, 0, 2, 3))                  # (B, NH*KS, OH, OW)


if __name__ == "__main__":
    B, Cin, H, W = 2, 4, 16, 16
    num_heads, key_size = 2, 4
    kernel_size, stride, padding = 4, 4, 0

    key = jax.random.PRNGKey(0)
    kx, kp = jax.random.split(key)
    x = jax.random.normal(kx, (B, Cin, H, W), jnp.float32)
    params = init_params(kp, Cin, num_heads, key_size)

    out = local_attention_2d(x, params, num_heads=num_heads, key_size=key_size,
                             kernel_size=kernel_size, stride=stride,
                             padding=padding)
    out = jax.block_until_ready(out)

    OH = (H + 2 * padding - kernel_size) // stride + 1
    OW = (W + 2 * padding - kernel_size) // stride + 1
    assert out.shape == (B, num_heads * key_size, OH, OW), out.shape
    assert bool(jnp.all(jnp.isfinite(out)))
    print("KERNEL_OK")
</pallas_src>

<mosaic_0001>
module attributes {stable_mosaic.version = 11 : i64} {
  func.func @conv_moments_kernel(%arg0: i32, %arg1: i32, %arg2: memref<1x4x256xbf16, #tpu.memory_space<vmem>>, %arg3: memref<24x4xbf16, #tpu.memory_space<vmem>>, %arg4: memref<24x1xf32, #tpu.memory_space<vmem>>, %arg5: memref<1x24x256xf32, #tpu.memory_space<vmem>>, %arg6: memref<1x24x1xf32, #tpu.memory_space<vmem>>, %arg7: memref<1x24x1xf32, #tpu.memory_space<vmem>>) attributes {dimension_semantics = [#tpu.dimension_semantics<parallel>, #tpu.dimension_semantics<arbitrary>], iteration_bounds = array<i64: 2, 1>, scalar_prefetch = 0 : i64, scratch_operands = 0 : i64, tpu.core_type = #tpu.core_type<tc>, window_params = [{transform_indices = @transform_0, window_bounds = array<i64: 1, 4, 256>}, {pipeline_mode = #tpu.pipeline_mode<synchronous>, transform_indices = @transform_1, window_bounds = array<i64: 24, 4>}, {pipeline_mode = #tpu.pipeline_mode<synchronous>, transform_indices = @transform_2, window_bounds = array<i64: 24, 1>}, {transform_indices = @transform_3, window_bounds = array<i64: 1, 24, 256>}, {transform_indices = @transform_4, window_bounds = array<i64: 1, 24, 1>}, {transform_indices = @transform_5, window_bounds = array<i64: 1, 24, 1>}]} {
    %c0 = arith.constant 0 : index
    %c0_0 = arith.constant 0 : index
    %c0_1 = arith.constant 0 : index
    %0 = vector.load %arg2[%c0, %c0_0, %c0_1] : memref<1x4x256xbf16, #tpu.memory_space<vmem>>, vector<1x4x256xbf16>
    %1 = vector.shape_cast %0 : vector<1x4x256xbf16> to vector<4x256xbf16>
    %c0_2 = arith.constant 0 : index
    %c0_3 = arith.constant 0 : index
    %2 = vector.load %arg3[%c0_2, %c0_3] : memref<24x4xbf16, #tpu.memory_space<vmem>>, vector<24x4xbf16>
    %cst = arith.constant dense<0.000000e+00> : vector<24x256xf32>
    %3 = tpu.matmul %2, %1, %cst {dimension_numbers = #tpu.dot_dimension_numbers<[1], [0], [0], [1], [0, 0, 1, 1], [], []>} : vector<24x4xbf16>, vector<4x256xbf16>, vector<24x256xf32> -> vector<24x256xf32>
    %c0_4 = arith.constant 0 : index
    %c0_5 = arith.constant 0 : index
    %4 = vector.load %arg4[%c0_4, %c0_5] : memref<24x1xf32, #tpu.memory_space<vmem>>, vector<24x1xf32>
    %5 = vector.broadcast %4 : vector<24x1xf32> to vector<24x256xf32>
    %6 = arith.addf %3, %5 : vector<24x256xf32>
    %c0_6 = arith.constant 0 : index
    %c0_7 = arith.constant 0 : index
    %c0_8 = arith.constant 0 : index
    %7 = vector.load %arg5[%c0_6, %c0_7, %c0_8] : memref<1x24x256xf32, #tpu.memory_space<vmem>>, vector<1x24x256xf32>
    %8 = vector.shape_cast %7 : vector<1x24x256xf32> to vector<24x256xf32>
    %9 = vector.shape_cast %6 : vector<24x256xf32> to vector<1x24x256xf32>
    tpu.vector_store %arg5[%c0_6, %c0_7, %c0_8], %9 {strides = array<i32>} : memref<1x24x256xf32, #tpu.memory_space<vmem>>, vector<1x24x256xf32>,
    %c0_i32 = arith.constant 0 : i32
    %10 = arith.cmpi eq, %arg1, %c0_i32 : i32
    %11 = arith.extui %10 : i1 to i32
    %c0_i32_9 = arith.constant 0 : i32
    %12 = arith.cmpi ne, %11, %c0_i32_9 : i32
    scf.if %12 {
      %cst_26 = arith.constant 0.000000e+00 : f32
      %36 = vector.broadcast %cst_26 : f32 to vector<1x24x1xf32>
      %c0_27 = arith.constant 0 : index
      %c0_28 = arith.constant 0 : index
      %c0_29 = arith.constant 0 : index
      %37 = vector.load %arg6[%c0_27, %c0_28, %c0_29] : memref<1x24x1xf32, #tpu.memory_space<vmem>>, vector<1x24x1xf32>
      tpu.vector_store %arg6[%c0_27, %c0_28, %c0_29], %36 {strides = array<i32>} : memref<1x24x1xf32, #tpu.memory_space<vmem>>, vector<1x24x1xf32>,
      %cst_30 = arith.constant 0.000000e+00 : f32
      %38 = vector.broadcast %cst_30 : f32 to vector<1x24x1xf32>
      %c0_31 = arith.constant 0 : index
      %c0_32 = arith.constant 0 : index
      %c0_33 = arith.constant 0 : index
      %39 = vector.load %arg7[%c0_31, %c0_32, %c0_33] : memref<1x24x1xf32, #tpu.memory_space<vmem>>, vector<1x24x1xf32>
      tpu.vector_store %arg7[%c0_31, %c0_32, %c0_33], %38 {strides = array<i32>} : memref<1x24x1xf32, #tpu.memory_space<vmem>>, vector<1x24x1xf32>,
    } else {
    }
    %13 = tpu.iota {dimensions = array<i32: 1>} : vector<1x256xi32>
    %c256_i32 = arith.constant 256 : i32
    %14 = arith.muli %arg1, %c256_i32 : i32
    %15 = vector.broadcast %14 : i32 to vector<1x256xi32>
    %16 = arith.addi %13, %15 : vector<1x256xi32>
    %c256_i32_10 = arith.constant 256 : i32
    %17 = vector.broadcast %c256_i32_10 : i32 to vector<1x256xi32>
    %18 = arith.cmpi slt, %16, %17 : vector<1x256xi32>
    %cst_11 = arith.constant 0.000000e+00 : f32
    %19 = vector.shape_cast %18 : vector<1x256xi1> to vector<1x256xi1>
    %20 = vector.broadcast %19 : vector<1x256xi1> to vector<24x256xi1>
    %21 = vector.broadcast %cst_11 : f32 to vector<24x256xf32>
    %22 = arith.select %20, %6, %21 : vector<24x256xi1>, vector<24x256xf32>
    %c0_12 = arith.constant 0 : index
    %c0_13 = arith.constant 0 : index
    %c0_14 = arith.constant 0 : index
    %23 = vector.load %arg6[%c0_12, %c0_13, %c0_14] : memref<1x24x1xf32, #tpu.memory_space<vmem>>, vector<1x24x1xf32>
    %cst_15 = arith.constant dense<0.000000e+00> : vector<24xf32>
    %24 = vector.multi_reduction <add>, %22, %cst_15 [1] : vector<24x256xf32> to vector<24xf32>
    %25 = vector.shape_cast %24 : vector<24xf32> to vector<24x1xf32>
    %26 = vector.shape_cast %25 : vector<24x1xf32> to vector<1x24x1xf32>
    %27 = arith.addf %23, %26 : vector<1x24x1xf32>
    %c0_16 = arith.constant 0 : index
    %c0_17 = arith.constant 0 : index
    %c0_18 = arith.constant 0 : index
    %28 = vector.load %arg6[%c0_16, %c0_17, %c0_18] : memref<1x24x1xf32, #tpu.memory_space<vmem>>, vector<1x24x1xf32>
    tpu.vector_store %arg6[%c0_16, %c0_17, %c0_18], %27 {strides = array<i32>} : memref<1x24x1xf32, #tpu.memory_space<vmem>>, vector<1x24x1xf32>,
    %c0_19 = arith.constant 0 : index
    %c0_20 = arith.constant 0 : index
    %c0_21 = arith.constant 0 : index
    %29 = vector.load %arg7[%c0_19, %c0_20, %c0_21] : memref<1x24x1xf32, #tpu.memory_space<vmem>>, vector<1x24x1xf32>
    %30 = arith.mulf %22, %22 : vector<24x256xf32>
    %cst_22 = arith.constant dense<0.000000e+00> : vector<24xf32>
    %31 = vector.multi_reduction <add>, %30, %cst_22 [1] : vector<24x256xf32> to vector<24xf32>
    %32 = vector.shape_cast %31 : vector<24xf32> to vector<24x1xf32>
    %33 = vector.shape_cast %32 : vector<24x1xf32> to vector<1x24x1xf32>
    %34 = arith.addf %29, %33 : vector<1x24x1xf32>
    %c0_23 = arith.constant 0 : index
    %c0_24 = arith.constant 0 : index
    %c0_25 = arith.constant 0 : index
    %35 = vector.load %arg7[%c0_23, %c0_24, %c0_25] : memref<1x24x1xf32, #tpu.memory_space<vmem>>, vector<1x24x1xf32>
    tpu.vector_store %arg7[%c0_23, %c0_24, %c0_25], %34 {strides = array<i32>} : memref<1x24x1xf32, #tpu.memory_space<vmem>>, vector<1x24x1xf32>,
    return
  }
  func.func @transform_0(%arg0: i32, %arg1: i32) -> (i32, i32, i32) {
    %c0_i32 = arith.constant 0 : i32
    %c0_i32_0 = arith.constant 0 : i32
    return %arg0, %c0_i32, %arg1 : i32, i32, i32
  }
  func.func @transform_1(%arg0: i32, %arg1: i32) -> (i32, i32) {
    %c0_i32 = arith.constant 0 : i32
    %c0_i32_0 = arith.constant 0 : i32
    %c0_i32_1 = arith.constant 0 : i32
    return %c0_i32, %c0_i32_0 : i32, i32
  }
  func.func @transform_2(%arg0: i32, %arg1: i32) -> (i32, i32) {
    %c0_i32 = arith.constant 0 : i32
    %c0_i32_0 = arith.constant 0 : i32
    %c0_i32_1 = arith.constant 0 : i32
    return %c0_i32, %c0_i32_0 : i32, i32
  }
  func.func @transform_3(%arg0: i32, %arg1: i32) -> (i32, i32, i32) {
    %c0_i32 = arith.constant 0 : i32
    %c0_i32_0 = arith.constant 0 : i32
    return %arg0, %c0_i32, %arg1 : i32, i32, i32
  }
  func.func @transform_4(%arg0: i32, %arg1: i32) -> (i32, i32, i32) {
    %c0_i32 = arith.constant 0 : i32
    %c0_i32_0 = arith.constant 0 : i32
    %c0_i32_1 = arith.constant 0 : i32
    return %arg0, %c0_i32, %c0_i32_0 : i32, i32, i32
  }
  func.func @transform_5(%arg0: i32, %arg1: i32) -> (i32, i32, i32) {
    %c0_i32 = arith.constant 0 : i32
    %c0_i32_0 = arith.constant 0 : i32
    %c0_i32_1 = arith.constant 0 : i32
    return %arg0, %c0_i32, %c0_i32_0 : i32, i32, i32
  }
}

</mosaic_0001>

<llo_original>
// kernel: tpu_custom_call.1
$region0: #{tpu_custom_call.1}
  #allocation0 [shape = 'u32[]', space=smem, size = 0x4, offset = 0x4, fixed_abs, tag = 'smem constant byte address 0x4 - core index']
  #allocation1 [shape = 'u32[72,128]{1,0:T(1,128)}', space=vmem, size = 0x9000, scoped, tag = 'internal scratch']
  %s0 = inlined_call_operand.vmem [shape: bf16[2,4,256], index: 0, kind: input, shape index: {}]
  %s1 = inlined_call_operand.vmem [shape: bf16[24,4], index: 1, kind: input, shape index: {}]
  %s2 = inlined_call_operand.vmem [shape: f32[24,1], index: 2, kind: input, shape index: {}]
  %s3 = inlined_call_operand.hbm [shape: f32[2,24,256], index: 3, kind: output, shape index: {0}]
  %s4 = inlined_call_operand.vmem [shape: f32[2,24,1], index: 4, kind: output, shape index: {1}]
  %s5 = inlined_call_operand.vmem [shape: f32[2,24,1], index: 5, kind: output, shape index: {2}]
  %6 = xla_tuple %s3, %s4, %s5
  %s7 = sld [smem:[#allocation0]]
  $region65: #{tpu_custom_call.1} parent=0
    _
  %s9 = ssub.s32 1, %s7
  %s10 = scalar_select 0, %s9, %s7
  $region1: #{tpu_custom_call.1} parent=0
    #allocation2 [shape = 'u8[49152]{0}', space=vmem, size = 0xc000, scoped, tag = 'output window, operand 0']
    #allocation3 [shape = 's32[2]{0}', space=sflag, size = 0x8, scoped, tag = 'scoped memory for tpu_custom_call.1']
    %11 = vsyncpa [#allocation3], 0
    %s12 = scalar_lea.sflag [#allocation3], 1
    %13 = vsyncpa %s12, 0
    loop: start=0, step=1, limit=4
    $region2: #{tpu_custom_call.1} parent=1 // loop_pre_header
      _
    $region3: #{tpu_custom_call.1} parent=1 // loop_header
      %s15 = sphi 0, %s19
      %p16 = scmp.ge.s32.totalorder %s15, 4
      %s22 = sphi 0, %s34
      %s23 = sphi 0, %s30
      %s24 = sphi 0, %s22
      %s25 = sphi 0, %s23
      %s26 = sphi 0, %s24
      %s27 = sphi 0, %s25
      %s39 = sphi 0, %s41
      %s42 = sphi 0, %s39
      %s43 = sphi 0, %s42
      %s59 = sphi 0, %s43
      %s63 = sphi 0, %s63
      %s65 = sphi 0, %s63
      %s66 = sphi 0, %s65
      %s80 = sphi 0, %s66
      %s84 = sphi 0, %s84
      %s86 = sphi 0, %s84
      %s87 = sphi 0, %s86
      %s101 = sphi 0, %s87
      %s109 = sphi 0, %s111
      %s112 = sphi 0, %s109
      %s113 = sphi 0, %s112
      %s129 = sphi 0, %s113
      %s135 = sphi 0, %s137
      %s138 = sphi 0, %s135
      %s139 = sphi 0, %s138
      %s155 = sphi 0, %s139
      %s161 = sphi 0, %s163
      %s164 = sphi 0, %s161
      %s165 = sphi 0, %s164
      %s181 = sphi 0, %s165
    $region4: #{tpu_custom_call.1} parent=1 // loop_header_branch
      %18 = sbr.rel (%p16) target = $region8
    $region5: #{tpu_custom_call.1} parent=1 // loop_body
      %s20 = ssub.s32 %s15, 1
      %s21 = ssub.s32 %s15, 2
      %s28 = sadd.s32 1, %s23
      %p29 = scmp.ge.s32.totalorder %s28, 1
      %s30 = scalar_select %p29, 0, %s28
      %s31 = sadd.s32 1, %s22
      %s32 = scalar_select %p29, %s31, %s22
      %p33 = scmp.ge.s32.totalorder %s32, 2
      %s34 = scalar_select %p33, 0, %s32
      %s35 = ssub.s32 %s22, %s34
      %s36 = ssub.s32 %s23, %s30
      %s37 = sor.u32 %s35, %s36
      %p38 = scmp.eq.s32.totalorder %s37, 0
      %s40 = sadd.s32 %s39, 1
      %s41 = scalar_select %p38, %s39, %s40
      %p44 = pneg %p38
      %p45 = scmp.eq.s32.totalorder %s15, 1
      %p46 = por %p44, %p45
      %p47 = scmp.ne.s32.totalorder %s39, %s42
      %p48 = scmp.eq.s32.totalorder %s15, 0
      %p49 = por %p47, %p48
      %p50 = scmp.ne.s32.totalorder %s39, %s42
      %p51 = scmp.eq.s32.totalorder %s20, 1
      %p52 = por %p50, %p51
      %p53 = scmp.ne.s32.totalorder %s42, %s43
      %p54 = scmp.eq.s32.totalorder %s20, 0
      %p55 = por %p53, %p54
      %p56 = scmp.ne.s32.totalorder %s42, %s43
      %p57 = scmp.eq.s32.totalorder %s21, 1
      %p58 = por %p56, %p57
      %p60 = scmp.ne.s32.totalorder %s43, %s59
      %p61 = scmp.eq.s32.totalorder %s21, 0
      %p62 = por %p60, %p61
      %s64 = sadd.s32 %s63, 1
      %p67 = scmp.eq.s32.totalorder %s15, 1
      %p68 = scmp.ne.s32.totalorder %s63, %s65
      %p69 = scmp.eq.s32.totalorder %s15, 0
      %p70 = por %p68, %p69
      %p71 = scmp.ne.s32.totalorder %s63, %s65
      %p72 = scmp.eq.s32.totalorder %s20, 1
      %p73 = por %p71, %p72
      %p74 = scmp.ne.s32.totalorder %s65, %s66
      %p75 = scmp.eq.s32.totalorder %s20, 0
      %p76 = por %p74, %p75
      %p77 = scmp.ne.s32.totalorder %s65, %s66
      %p78 = scmp.eq.s32.totalorder %s21, 1
      %p79 = por %p77, %p78
      %p81 = scmp.ne.s32.totalorder %s66, %s80
      %p82 = scmp.eq.s32.totalorder %s21, 0
      %p83 = por %p81, %p82
      %s85 = sadd.s32 %s84, 1
      %p88 = scmp.eq.s32.totalorder %s15, 1
      %p89 = scmp.ne.s32.totalorder %s84, %s86
      %p90 = scmp.eq.s32.totalorder %s15, 0
      %p91 = por %p89, %p90
      %p92 = scmp.ne.s32.totalorder %s84, %s86
      %p93 = scmp.eq.s32.totalorder %s20, 1
      %p94 = por %p92, %p93
      %p95 = scmp.ne.s32.totalorder %s86, %s87
      %p96 = scmp.eq.s32.totalorder %s20, 0
      %p97 = por %p95, %p96
      %p98 = scmp.ne.s32.totalorder %s86, %s87
      %p99 = scmp.eq.s32.totalorder %s21, 1
      %p100 = por %p98, %p99
      %p102 = scmp.ne.s32.totalorder %s87, %s101
      %p103 = scmp.eq.s32.totalorder %s21, 0
      %p104 = por %p102, %p103
      %s105 = ssub.s32 %s22, %s34
      %s106 = ssub.s32 %s23, %s30
      %s107 = sor.u32 %s105, %s106
      %p108 = scmp.eq.s32.totalorder %s107, 0
      %s110 = sadd.s32 %s109, 1
      %s111 = scalar_select %p108, %s109, %s110
      %p114 = pneg %p108
      %p115 = scmp.eq.s32.totalorder %s15, 1
      %p116 = por %p114, %p115
      %p117 = scmp.ne.s32.totalorder %s109, %s112
      %p118 = scmp.eq.s32.totalorder %s15, 0
      %p119 = por %p117, %p118
      %p120 = scmp.ne.s32.totalorder %s109, %s112
      %p121 = scmp.eq.s32.totalorder %s20, 1
      %p122 = por %p120, %p121
      %p123 = scmp.ne.s32.totalorder %s112, %s113
      %p124 = scmp.eq.s32.totalorder %s20, 0
      %p125 = por %p123, %p124
      %p126 = scmp.ne.s32.totalorder %s112, %s113
      %p127 = scmp.eq.s32.totalorder %s21, 1
      %p128 = por %p126, %p127
      %p130 = scmp.ne.s32.totalorder %s113, %s129
      %p131 = scmp.eq.s32.totalorder %s21, 0
      %p132 = por %p130, %p131
      %s133 = ssub.s32 %s22, %s34
      %p134 = scmp.eq.s32.totalorder %s133, 0
      %s136 = sadd.s32 %s135, 1
      %s137 = scalar_select %p134, %s135, %s136
      %p140 = pneg %p134
      %p141 = scmp.eq.s32.totalorder %s15, 1
      %p142 = por %p140, %p141
      %p143 = scmp.ne.s32.totalorder %s135, %s138
      %p144 = scmp.eq.s32.totalorder %s15, 0
      %p145 = por %p143, %p144
      %p146 = scmp.ne.s32.totalorder %s135, %s138
      %p147 = scmp.eq.s32.totalorder %s20, 1
      %p148 = por %p146, %p147
      %p149 = scmp.ne.s32.totalorder %s138, %s139
      %p150 = scmp.eq.s32.totalorder %s20, 0
      %p151 = por %p149, %p150
      %p152 = scmp.ne.s32.totalorder %s138, %s139
      %p153 = scmp.eq.s32.totalorder %s21, 1
      %p154 = por %p152, %p153
      %p156 = scmp.ne.s32.totalorder %s139, %s155
      %p157 = scmp.eq.s32.totalorder %s21, 0
      %p158 = por %p156, %p157
      %s159 = ssub.s32 %s22, %s34
      %p160 = scmp.eq.s32.totalorder %s159, 0
      %s162 = sadd.s32 %s161, 1
      %s163 = scalar_select %p160, %s161, %s162
      %p166 = pneg %p160
      %p167 = scmp.eq.s32.totalorder %s15, 1
      %p168 = por %p166, %p167
      %p169 = scmp.ne.s32.totalorder %s161, %s164
      %p170 = scmp.eq.s32.totalorder %s15, 0
      %p171 = por %p169, %p170
      %p172 = scmp.ne.s32.totalorder %s161, %s164
      %p173 = scmp.eq.s32.totalorder %s20, 1
      %p174 = por %p172, %p173
      %p175 = scmp.ne.s32.totalorder %s164, %s165
      %p176 = scmp.eq.s32.totalorder %s20, 0
      %p177 = por %p175, %p176
      %p178 = scmp.ne.s32.totalorder %s164, %s165
      %p179 = scmp.eq.s32.totalorder %s21, 1
      %p180 = por %p178, %p179
      %p182 = scmp.ne.s32.totalorder %s165, %s181
      %p183 = scmp.eq.s32.totalorder %s21, 0
      %p184 = por %p182, %p183
      %p185 = scmp.le.s32.totalorder 1, %s15
      %p186 = scmp.lt.s32.totalorder %s15, 3
      %p187 = pnand %p185, %p186
      %p188 = pneg %p187
      // Predicated region
      $region9: #{tpu_custom_call.1} parent=5 // pred_check
        _
      $region10: #{tpu_custom_call.1} parent=5 // pred_check_branch
        %190 = sbr.rel (%p187) target = $region12
      $region11: #{tpu_custom_call.1} parent=5 // pred_region
        %s191 = ssub.s32 %s15, 1
        // Predicated region
        $region13: #{tpu_custom_call.1} parent=11 // pred_check
          %p192 = pneg %p76
        $region14: #{tpu_custom_call.1} parent=11 // pred_check_branch
          %194 = sbr.rel (%p192) target = $region16
        $region15: #{tpu_custom_call.1} parent=11 // pred_region
          _
        $region16: #{tpu_custom_call.1} parent=11 // pred_fallthru
          _
        // Predicated region
        $region17: #{tpu_custom_call.1} parent=11 // pred_check
          %p195 = pneg %p97
        $region18: #{tpu_custom_call.1} parent=11 // pred_check_branch
          %197 = sbr.rel (%p195) target = $region20
        $region19: #{tpu_custom_call.1} parent=11 // pred_region
          _
        $region20: #{tpu_custom_call.1} parent=11 // pred_fallthru
          _
      $region12: #{tpu_custom_call.1} parent=5 // pred_fallthru
        _
      %p198 = scmp.lt.s32.totalorder %s15, 2
      // Predicated region
      $region21: #{tpu_custom_call.1} parent=5 // pred_check
        %p199 = pneg %p198
      $region22: #{tpu_custom_call.1} parent=5 // pred_check_branch
        %201 = sbr.rel (%p199) target = $region24
      $region23: #{tpu_custom_call.1} parent=5 // pred_region
        // Predicated region
        $region25: #{tpu_custom_call.1} parent=23 // pred_check
          %p202 = pneg %p49
        $region26: #{tpu_custom_call.1} parent=23 // pred_check_branch
          %204 = sbr.rel (%p202) target = $region28
        $region27: #{tpu_custom_call.1} parent=23 // pred_region
          %s205 = smul.u32 2, %s23
          %p206 = scmp.lt.s32.totalorder %s22, 1
          %s207 = scalar_select %p206, %s22, 1
          %p208 = scmp.lt.s32.totalorder %s205, 1
          %s209 = scalar_select %p208, %s205, 1
          %s210 = smul.addr %s207, 2
          %s211 = sadd.s32 %s209, %s210
          %s212 = smul.addr %s211, 2
          %s213 = scalar_lea.vmem %s0, %s212
          %s214 = smul.u32 2, %s23
        $region28: #{tpu_custom_call.1} parent=23 // pred_fallthru
          _
      $region24: #{tpu_custom_call.1} parent=5 // pred_fallthru
        _
      %p215 = scmp.le.s32.totalorder 1, %s15
      %p216 = scmp.lt.s32.totalorder %s15, 3
      %p217 = pnand %p215, %p216
      %p218 = pneg %p217
      // Predicated region
      $region29: #{tpu_custom_call.1} parent=5 // pred_check
        _
      $region30: #{tpu_custom_call.1} parent=5 // pred_check_branch
        %220 = sbr.rel (%p217) target = $region32
      $region31: #{tpu_custom_call.1} parent=5 // pred_region
        %s221 = ssub.s32 %s15, 1
        %s222 = smul.u32 2, %s25
        %p223 = scmp.lt.s32.totalorder %s24, 1
        %s224 = scalar_select %p223, %s24, 1
        %p225 = scmp.lt.s32.totalorder %s222, 1
        %s226 = scalar_select %p225, %s222, 1
        %s227 = smul.addr %s224, 2
        %s228 = sadd.s32 %s226, %s227
        %s229 = smul.addr %s228, 2
        %s230 = scalar_lea.vmem %s0, %s229
        %p231 = pneg %p55
        %p232 = pneg %p52
        %p233 = pneg %p76
        %p234 = pneg %p73
        %p235 = pneg %p97
        %p236 = pneg %p94
        %p237 = pneg %p125
        %p238 = pneg %p122
        %s239 = sand.u32 %s112, 1
        %s240 = scalar_lea.sflag [#allocation3], %s239
        %s241 = sand.u32 %s112, 1
        %s242 = smul.addr %s241, 48
        %s243 = scalar_lea.vmem [#allocation2], %s242
        %p244 = pneg %p151
        %p245 = pneg %p148
        %p246 = scmp.lt.s32.totalorder %s24, 1
        %s247 = scalar_select %p246, %s24, 1
        %s248 = smul.addr %s247, 3
        %s249 = smul.addr %s248, 8
        %s250 = scalar_lea.vmem %s4, %s249
        %p251 = pneg %p177
        %p252 = pneg %p174
        %p253 = scmp.lt.s32.totalorder %s24, 1
        %s254 = scalar_select %p253, %s24, 1
        %s255 = smul.addr %s254, 3
        %s256 = smul.addr %s255, 8
        %s257 = scalar_lea.vmem %s5, %s256
        %s258 = smul.u32 2, %s25
        %p259 = scmp.lt.s32.totalorder %s24, 1
        %s260 = scalar_select %p259, %s24, 1
        %p261 = scmp.lt.s32.totalorder %s258, 1
        %s262 = scalar_select %p261, %s258, 1
        %s263 = smul.addr %s260, 2
        %s264 = sadd.s32 %s262, %s263
        %s265 = smul.addr %s264, 2
        %s266 = scalar_lea.vmem %s0, %s265
        %s267 = smul.u32 2, %s25
        %s268 = smul.u32 2, %s25
        %p269 = scmp.lt.s32.totalorder %s24, 1
        %s270 = scalar_select %p269, %s24, 1
        %s271 = smul.addr %s270, 3
        %s272 = smul.addr %s271, 8
        %s273 = scalar_lea.vmem %s4, %s272
        %p274 = scmp.lt.s32.totalorder %s24, 1
        %s275 = scalar_select %p274, %s24, 1
        %s276 = smul.addr %s275, 3
        %s277 = smul.addr %s276, 8
        %s278 = scalar_lea.vmem %s5, %s277
        %v280 = vld [vmem:[%s266] sm:$0xf]
        %v281 = vld [vmem:[%s1] sm:$0xf]
        %v282 = vld [vmem:[%s1 + $0x4] sm:$0xf]
        %v283 = vld [vmem:[%s1 + $0x8] sm:$0xf]
        %v284 = vld [vmem:[%s2] sm:$0xff]
        %v285 = vld [vmem:[%s2 + $0x8] sm:$0xff]
        %v286 = vld [vmem:[%s2 + $0x10] sm:$0xff]
        %288 = vset.pattern.permute.xlu0 0
        %289 = vperm.xlu0 %288, %v284
        %v290 = vpop.permute.xlu0 %289
        %293 = vset.pattern.permute.xlu0 0
        %294 = vperm.xlu0 %293, %v285
        %v295 = vpop.permute.xlu0 %294
        %298 = vset.pattern.permute.xlu0 0
        %299 = vperm.xlu0 %298, %v286
        %v300 = vpop.permute.xlu0 %299
        %v305 = vunpack.c.l.b16 %v281
        %v306 = vunpack.c.l.b16 %v282
        %v307 = vunpack.c.l.b16 %v283
        %v308 = vpack.c.b16 %v306, %v305
        %v309 = vpack.c.b16 %v307, %v307
        %311 = vst [vmem:[#allocation1] ss:$4 sm:$0xff] %v280
        %v312 = vld.sshfl [vmem:[#allocation1] sm:$0xff pattern:$0x73625140]
        %v313 = vld.sshfl [vmem:[#allocation1 + $0x8] sm:$0xff pattern:$0x73625140]
        %vm314 = vcmask 31744
        %v316 = vsel %vm314, %v308, 0
        %v319 = vsel %vm314, %v309, 0
        %vm321 = vcmask 1041408
        %v322 = vsel %vm321, %v312, 0
        %v324 = vsel %vm321, %v313, 0
        %326 = vmatpush.bf16.msra.mxu0 0
        %327 = vmatpush.bf16.msra.mxu0 0
        %328 = vmatpush.bf16.msra.mxu0 0
        %329 = vmatpush.bf16.msra.mxu0 0
        %330 = vmatpush.bf16.msra.mxu0 0
        %331 = vmatpush.bf16.msra.mxu0 0
        %332 = vmatpush.bf16.msra.mxu0 0
        %333 = vmatpush.bf16.msra.mxu0 %v322
        %334 = vmatmul.bf16.gmra.mxu0 %v316
        %v335 = vpop.f32.mrf.mxu0
        %v336 = vadd.f32 %v290, %v335
        %v337 = vpop.f32.mrf.mxu0
        %v338 = vadd.f32 %v295, %v337
        %339 = vmatmul.bf16.gmra.mxu0 %v319
        %v340 = vpop.f32.mrf.mxu0
        %v341 = vadd.f32 %v300, %v340
        %v342 = vpop.f32.mrf.mxu0
        %343 = vdwg.mxu0
        %344 = vmatpush.bf16.msra.mxu0 0
        %345 = vmatpush.bf16.msra.mxu0 0
        %346 = vmatpush.bf16.msra.mxu0 0
        %347 = vmatpush.bf16.msra.mxu0 0
        %348 = vmatpush.bf16.msra.mxu0 0
        %349 = vmatpush.bf16.msra.mxu0 0
        %350 = vmatpush.bf16.msra.mxu0 0
        %351 = vmatpush.bf16.msra.mxu0 %v324
        %352 = vmatmul.bf16.gmra.mxu0 %v316
        %v353 = vpop.f32.mrf.mxu0
        %v354 = vadd.f32 %v290, %v353
        %v355 = vpop.f32.mrf.mxu0
        %v356 = vadd.f32 %v295, %v355
        %357 = vmatmul.bf16.gmra.mxu0 %v319
        %v358 = vpop.f32.mrf.mxu0
        %v359 = vadd.f32 %v300, %v358
        %v360 = vpop.f32.mrf.mxu0
        %361 = vdwg.mxu0
        %362 = vst [vmem:[%s243] sm:$0xff] %v336
        %363 = vst [vmem:[%s243 + $0x8] sm:$0xff] %v354
        %364 = vst [vmem:[%s243 + $0x10] sm:$0xff] %v338
        %365 = vst [vmem:[%s243 + $0x18] sm:$0xff] %v356
        %366 = vst [vmem:[%s243 + $0x20] sm:$0xff] %v341
        %367 = vst [vmem:[%s243 + $0x28] sm:$0xff] %v359
        %p368 = scmp.eq.s32.totalorder %s25, 0
        // Predicated region
        $region33: #{tpu_custom_call.1} parent=31 // pred_check
          %p369 = pneg %p368
        $region34: #{tpu_custom_call.1} parent=31 // pred_check_branch
          %371 = sbr.rel (%p369) target = $region36
        $region35: #{tpu_custom_call.1} parent=31 // pred_region
          %vm372 = vcmask 7168
          %373 = vst.msk [vmem:[%s273] sm:$0xff] %vm372, 0.0
          %374 = vst.msk [vmem:[%s273 + $0x8] sm:$0xff] %vm372, 0.0
          %375 = vst.msk [vmem:[%s273 + $0x10] sm:$0xff] %vm372, 0.0
          %376 = vst.msk [vmem:[%s278] sm:$0xff] %vm372, 0.0
          %377 = vst.msk [vmem:[%s278 + $0x8] sm:$0xff] %vm372, 0.0
          %378 = vst.msk [vmem:[%s278 + $0x10] sm:$0xff] %vm372, 0.0
        $region36: #{tpu_custom_call.1} parent=31 // pred_fallthru
          _
        %v379 = vlaneseq
        %v380 = vand.u32 %v379, 127
        %v381 = vadd.s32 %v380, 128
        %s382 = smul.u32 %s25, 256
        %v383 = vstv %s382
        %v384 = vadd.s32 %v380, %v383
        %v385 = vadd.s32 %v381, %v383
        %vm386 = vcmp.lt.s32.totalorder %v384, 256
        %vm387 = vcmp.lt.s32.totalorder %v385, 256
        %v388 = vsel %vm386, 1, 0
        %v389 = vsel %vm387, 1, 0
        %vm390 = vcmp.eq.s32.totalorder %v388, 1
        %vm391 = vcmp.eq.s32.totalorder %v389, 1
        %v392 = vsel %vm390, %v336, 0.0
        %v393 = vsel %vm391, %v354, 0.0
        %v394 = vsel %vm390, %v338, 0.0
        %v395 = vsel %vm391, %v356, 0.0
        %v396 = vsel %vm390, %v341, 0.0
        %v397 = vsel %vm391, %v359, 0.0
        %v398 = vld [vmem:[%s273] sm:$0xff]
        %v399 = vld [vmem:[%s273 + $0x8] sm:$0xff]
        %v400 = vld [vmem:[%s273 + $0x10] sm:$0xff]
        %v401 = vadd.f32 %v392, %v393
        %402 = vadd.xlane.f32.xlu0 %v401
        %v403 = vpop.xlane.xlu0 %402
        %v404 = vadd.f32 %v394, %v395
        %405 = vadd.xlane.f32.xlu0 %v404
        %v406 = vpop.xlane.xlu0 %405
        %v407 = vadd.f32 %v396, %v397
        %408 = vadd.xlane.f32.xlu0 %v407
        %v409 = vpop.xlane.xlu0 %408
        %v410 = vadd.f32 %v398, %v403
        %v411 = vadd.f32 %v399, %v406
        %v412 = vadd.f32 %v400, %v409
        %vm413 = vcmask 7168
        %414 = vst.msk [vmem:[%s273] sm:$0xff] %vm413, %v410
        %415 = vst.msk [vmem:[%s273 + $0x8] sm:$0xff] %vm413, %v411
        %416 = vst.msk [vmem:[%s273 + $0x10] sm:$0xff] %vm413, %v412
        %v417 = vld [vmem:[%s278] sm:$0xff]
        %v418 = vld [vmem:[%s278 + $0x8] sm:$0xff]
        %v419 = vld [vmem:[%s278 + $0x10] sm:$0xff]
        %v420 = vmul.f32 %v392, %v392
        %v421 = vmul.f32 %v393, %v393
        %v422 = vmul.f32 %v394, %v394
        %v423 = vmul.f32 %v395, %v395
        %v424 = vmul.f32 %v396, %v396
        %v425 = vmul.f32 %v397, %v397
        %v426 = vadd.f32 %v420, %v421
        %427 = vadd.xlane.f32.xlu0 %v426
        %v428 = vpop.xlane.xlu0 %427
        %v429 = vadd.f32 %v422, %v423
        %430 = vadd.xlane.f32.xlu0 %v429
        %v431 = vpop.xlane.xlu0 %430
        %v432 = vadd.f32 %v424, %v425
        %433 = vadd.xlane.f32.xlu0 %v432
        %v434 = vpop.xlane.xlu0 %433
        %v435 = vadd.f32 %v417, %v428
        %v436 = vadd.f32 %v418, %v431
        %v437 = vadd.f32 %v419, %v434
        %438 = vst.msk [vmem:[%s278] sm:$0xff] %vm413, %v435
        %439 = vst.msk [vmem:[%s278 + $0x8] sm:$0xff] %vm413, %v436
        %440 = vst.msk [vmem:[%s278 + $0x10] sm:$0xff] %vm413, %v437
        %s441 = sand.u32 %s112, 1
        %s442 = scalar_lea.sflag [#allocation3], %s441
        %s443 = sand.u32 %s112, 1
        %s444 = smul.addr %s443, 48
        %s445 = scalar_lea.vmem [#allocation2], %s444
        %p446 = scmp.lt.s32.totalorder %s24, 1
        %s447 = scalar_select %p446, %s24, 1
        %s448 = smul.addr %s447, 3
        %s449 = smul.addr %s448, 8
        %s450 = scalar_lea.vmem %s4, %s449
        %p451 = scmp.lt.s32.totalorder %s24, 1
        %s452 = scalar_select %p451, %s24, 1
        %s453 = smul.addr %s452, 3
        %s454 = smul.addr %s453, 8
        %s455 = scalar_lea.vmem %s5, %s454
        // Predicated region
        $region37: #{tpu_custom_call.1} parent=31 // pred_check
          %p456 = pneg %p122
        $region38: #{tpu_custom_call.1} parent=31 // pred_check_branch
          %458 = sbr.rel (%p456) target = $region40
        $region39: #{tpu_custom_call.1} parent=31 // pred_region
          %s459 = smul.u32 2, %s25
          %461 = vsyncadd %s442, 0
          %s462 = smul.addr %s24, 6
          %s463 = sadd.s32 %s459, %s462
          %s464 = smul.addr %s463, 8
          %s465 = scalar_lea.hbm %s3, %s464
          %s466 = sshll.u32 %s445, 4
          %s467 = int_to_ptr.vmem [resolvable:$true] %s466
          %s468 = sshll.u32 %s465, 4
          %s469 = int_to_ptr.hbm [resolvable:$true] %s468
          %474 = dma.vmem_to_hbm [thread:$0]  %s467, 768, %s469, %s442, 256, 256, 16
        $region40: #{tpu_custom_call.1} parent=31 // pred_fallthru
          _
        // Predicated region
        $region41: #{tpu_custom_call.1} parent=31 // pred_check
          %p475 = pneg %p148
        $region42: #{tpu_custom_call.1} parent=31 // pred_check_branch
          %477 = sbr.rel (%p475) target = $region44
        $region43: #{tpu_custom_call.1} parent=31 // pred_region
          _
        $region44: #{tpu_custom_call.1} parent=31 // pred_fallthru
          _
        // Predicated region
        $region45: #{tpu_custom_call.1} parent=31 // pred_check
          %p478 = pneg %p174
        $region46: #{tpu_custom_call.1} parent=31 // pred_check_branch
          %480 = sbr.rel (%p478) target = $region48
        $region47: #{tpu_custom_call.1} parent=31 // pred_region
          _
        $region48: #{tpu_custom_call.1} parent=31 // pred_fallthru
          _
      $region32: #{tpu_custom_call.1} parent=5 // pred_fallthru
        _
      %p481 = scmp.le.s32.totalorder 2, %s15
      // Predicated region
      $region49: #{tpu_custom_call.1} parent=5 // pred_check
        %p482 = pneg %p481
      $region50: #{tpu_custom_call.1} parent=5 // pred_check_branch
        %484 = sbr.rel (%p482) target = $region52
      $region51: #{tpu_custom_call.1} parent=5 // pred_region
        %s485 = ssub.s32 %s15, 2
        // Predicated region
        $region53: #{tpu_custom_call.1} parent=51 // pred_check
          %p486 = pneg %p128
        $region54: #{tpu_custom_call.1} parent=51 // pred_check_branch
          %488 = sbr.rel (%p486) target = $region56
        $region55: #{tpu_custom_call.1} parent=51 // pred_region
          %s489 = sand.u32 %s113, 1
          %s490 = scalar_lea.sflag [#allocation3], %s489
          %s491 = sand.u32 %s113, 1
          %s492 = smul.addr %s491, 48
          %s493 = scalar_lea.vmem [#allocation2], %s492
          %495 = dma.done %s490, 768
        $region56: #{tpu_custom_call.1} parent=51 // pred_fallthru
          _
        // Predicated region
        $region57: #{tpu_custom_call.1} parent=51 // pred_check
          %p496 = pneg %p154
        $region58: #{tpu_custom_call.1} parent=51 // pred_check_branch
          %498 = sbr.rel (%p496) target = $region60
        $region59: #{tpu_custom_call.1} parent=51 // pred_region
          %p499 = scmp.lt.s32.totalorder %s26, 1
          %s500 = scalar_select %p499, %s26, 1
          %s501 = smul.addr %s500, 3
          %s502 = smul.addr %s501, 8
          %s503 = scalar_lea.vmem %s4, %s502
        $region60: #{tpu_custom_call.1} parent=51 // pred_fallthru
          _
        // Predicated region
        $region61: #{tpu_custom_call.1} parent=51 // pred_check
          %p504 = pneg %p180
        $region62: #{tpu_custom_call.1} parent=51 // pred_check_branch
          %506 = sbr.rel (%p504) target = $region64
        $region63: #{tpu_custom_call.1} parent=51 // pred_region
          %p507 = scmp.lt.s32.totalorder %s26, 1
          %s508 = scalar_select %p507, %s26, 1
          %s509 = smul.addr %s508, 3
          %s510 = smul.addr %s509, 8
          %s511 = scalar_lea.vmem %s5, %s510
        $region64: #{tpu_custom_call.1} parent=51 // pred_fallthru
          _
      $region52: #{tpu_custom_call.1} parent=5 // pred_fallthru
        _
    $region6: #{tpu_custom_call.1} parent=1 // loop_footer
      %s19 = sadd.s32 1, %s15
    $region7: #{tpu_custom_call.1} parent=1 // loop_footer_branch
      %14 = sbr.rel target = $region3
    $region8: #{tpu_custom_call.1} parent=1 // loop_exit
      _
    %512 = vsyncpa [#allocation3], 1
    %s513 = scalar_lea.sflag [#allocation3], 1
    %514 = vsyncpa %s513, 1

</llo_original>
